<compile_context>
chip_gen: v5e
topology: v5e:2x2
jax: 0.10.0
libtpu: 0.0.40
codegen_flags: <defaults>
</compile_context>

<pallas_src>
import numpy as np
import jax
import jax.numpy as jnp
from jax.experimental import pallas as pl
from jax.experimental.pallas import tpu as pltpu


def _round_up(x, m):
    return ((x + m - 1) // m) * m


def _tile(n, max_tile, align):
    """Pick a tile size (multiple of `align`, <= max_tile) and pad n to a multiple of it."""
    t = min(max_tile, _round_up(max(n, 1), align))
    return t, _round_up(max(n, 1), t)


# ---- Cody-Waite split of 2*pi.  n*P1 and n*P2 are exact in f32 for |n| < 2^18, so the
#      reduced angle of arguments up to ~1.6e6 rad (the 1e6 time sentinel) is accurate to ~1e-5. ----
_TWO_PI = 6.283185307179586
_INV_2PI = np.float32(1.0 / _TWO_PI)
_P1 = np.float32(6.25)                                   # 5 mantissa bits
_P2 = np.float32(0.0322265625)                           # 6 mantissa bits (= 33 * 2^-10)
_P3 = np.float32(_TWO_PI - 6.25 - 0.0322265625)          # remainder, full f32 precision


def _seg_mean_kernel(mask_ref, emb_ref, out_ref):
    """Segment mean as a matmul.

    mask_ref : [TG, TK]      rows hold 1/len_s[g] at that group's member columns (zero-padded)
    emb_ref  : [TK, h_pad]   gathered ent_embeds[flat_s] (zero-padded rows/cols)
    out_ref  : [TG, h_pad]   per-group mean embeddings (accumulated over the K grid axis)
    """
    @pl.when(pl.program_id(1) == 0)
    def _():
        out_ref[...] = jnp.zeros_like(out_ref)
    out_ref[...] += jnp.dot(mask_ref[...], emb_ref[...],
                            preferred_element_type=jnp.float32)


def _make_assemble_kernel(h_pad):
    def _assemble_kernel(idx_ref, mean_ref, targ_ref, out_ref):
        """Row-tiled scatter-by-gather + time embedding + lane-dense concat.

        idx_ref  : [TR, 1]            int32 row -> group index (padded rows point at a zero row)
        mean_ref : [G_pad, h_pad]     per-group means, resident across all row tiles
        targ_ref : [TR, t_pad]        precomputed f32 time arguments t_long * t_w + t_b
        out_ref  : [TR, h_pad+t_pad]  two 128-aligned slabs: [means | cos(time)]
        """
        # ---- scatter-by-gather: each output row picks its group's mean (replaces the R x G one-hot matmul)
        idx = idx_ref[...][:, 0]                                     # (TR,) int32
        out_ref[:, :h_pad] = jnp.take(mean_ref[...], idx, axis=0)    # lane-dense 128-wide slab store
        # ---- time embedding: exact-ish range reduction, then cos on the EUP (free slot)
        x = targ_ref[...]
        n = jnp.floor(x * _INV_2PI + 0.5)
        r = ((x - n * _P1) - n * _P2) - n * _P3                      # |r| ~<= pi
        out_ref[:, h_pad:] = jnp.cos(r)                              # lane-dense 128-wide slab store
    return _assemble_kernel


def mean_aggregator_forward(ent_embeds, flat_s, len_s, s_len_non_zero,
                            s_time_sorted, t_w, t_b, seq_len, h_dim, t_dim):
    """JAX/Pallas implementation of MeanAggregator.forward (eval-mode dropout)."""
    len_arr = np.asarray(len_s, np.int64)
    slnz = np.asarray(s_len_non_zero, np.int64)
    G = int(len_arr.size)
    N = int(slnz.size)
    total = int(len_arr.sum())
    R = N * seq_len

    h_pad = _round_up(h_dim, 128)
    t_pad = _round_up(t_dim, 128)
    TG, G_pad = _tile(G + 1, 256, 8)       # +1 guarantees at least one all-zero "padding" group row
    TK, K_pad = _tile(total, 512, 128)     # K (reduction) lane-aligned to 128
    TR, R_pad = _tile(R, 256, 8)           # row tile of the output sequence slab

    # ---------------- wrapper glue (vectorized construction, no O(R*G) Python loops) ----------------
    # gathered neighbor embeddings, zero-padded to (K_pad, h_pad)
    emb = jnp.take(ent_embeds, jnp.asarray(np.asarray(flat_s), jnp.int32), axis=0)
    emb = jnp.pad(emb.astype(jnp.float32), ((0, K_pad - total), (0, h_pad - h_dim)))

    # normalized segment mask: mask[g, c] = 1/len_s[g] for the columns c belonging to group g
    col_group = np.repeat(np.arange(G), len_arr)                     # (total,)
    inv_len = (1.0 / len_arr.astype(np.float64)).astype(np.float32)  # exact-ish 1/len in f32
    mask = np.zeros((G_pad, K_pad), np.float32)
    mask[col_group, np.arange(total)] = inv_len[col_group]

    # row -> group index table; padded sequence positions point at the all-zero row G
    grp_off = np.concatenate([[0], np.cumsum(slnz)[:-1]])            # (N,) group offset per example
    pos = np.arange(seq_len)[None, :]
    row2grp = np.where(pos < slnz[:, None], grp_off[:, None] + pos, G).reshape(R)
    row2grp = np.concatenate([row2grp, np.full(R_pad - R, G, np.int64)]).astype(np.int32)
    row2grp = row2grp.reshape(R_pad, 1)

    # time argument t_long * t_w + t_b, computed ONCE in f32 here so kernel and reference share a
    # bit-identical argument (cos of the ~1e6 sentinel is ill-conditioned in the last ulp of its arg);
    # the transcendental itself stays in-kernel.
    t_lens = np.asarray([len(ts) for ts in s_time_sorted], np.int64)
    time_mat = np.full((N, seq_len), 1.0e6, np.float32)              # padding sentinel, as in PyTorch
    if t_lens.sum() > 0:
        time_mat[np.repeat(np.arange(N), t_lens),
                 np.concatenate([np.arange(l) for l in t_lens])] = \
            np.concatenate([np.asarray(ts, np.float32) for ts in s_time_sorted])
    t_long = time_mat.astype(np.int64).astype(np.float32)            # .long() truncation
    targ = (t_long.reshape(R, 1) * np.asarray(t_w, np.float32).reshape(1, t_dim)
            + np.asarray(t_b, np.float32).reshape(1, t_dim))
    targ_pad = np.zeros((R_pad, t_pad), np.float32)
    targ_pad[:R, :t_dim] = targ

    mask_j = jnp.asarray(mask)
    row2grp_j = jnp.asarray(row2grp)
    targ_j = jnp.asarray(targ_pad)

    # ---------------- kernel A: per-group segment means ----------------
    means = pl.pallas_call(
        _seg_mean_kernel,
        out_shape=jax.ShapeDtypeStruct((G_pad, h_pad), jnp.float32),
        grid=(G_pad // TG, K_pad // TK),
        in_specs=[pl.BlockSpec((TG, TK), lambda g, k: (g, k)),
                  pl.BlockSpec((TK, h_pad), lambda g, k: (k, 0))],
        out_specs=pl.BlockSpec((TG, h_pad), lambda g, k: (g, 0)),
        compiler_params=pltpu.CompilerParams(
            dimension_semantics=("parallel", "arbitrary"),
            vmem_limit_bytes=32 * 1024 * 1024),
    )(mask_j, emb)

    # ---------------- kernel B: row-tiled gather + time cos + lane-dense concat ----------------
    out_pad = pl.pallas_call(
        _make_assemble_kernel(h_pad),
        out_shape=jax.ShapeDtypeStruct((R_pad, h_pad + t_pad), jnp.float32),
        grid=(R_pad // TR,),
        in_specs=[pl.BlockSpec((TR, 1), lambda r: (r, 0)),
                  pl.BlockSpec((G_pad, h_pad), lambda r: (0, 0)),    # means resident across row tiles
                  pl.BlockSpec((TR, t_pad), lambda r: (r, 0))],
        out_specs=pl.BlockSpec((TR, h_pad + t_pad), lambda r: (r, 0)),
        compiler_params=pltpu.CompilerParams(
            dimension_semantics=("parallel",),
            vmem_limit_bytes=32 * 1024 * 1024),
    )(row2grp_j, means, targ_j)

    # ---------------- strip padding and assemble the module's output layout ----------------
    s_part = out_pad[:R, :h_dim]
    t_part = out_pad[:R, h_pad:h_pad + t_dim]
    out = jnp.concatenate([s_part, t_part], axis=-1).reshape(N, seq_len, h_dim + t_dim)
    # nn.Dropout in eval mode is the identity.
    return out


def reference_forward(ent_embeds, flat_s, len_s, s_len_non_zero,
                      s_time_sorted, t_w, t_b, seq_len, h_dim, t_dim):
    """Pure-numpy reference mirroring the PyTorch code (cos evaluated accurately in f64)."""
    emb = np.asarray(ent_embeds)[np.asarray(flat_s, np.int64)]
    means, cur = [], 0
    for l in len_s:
        means.append(emb[cur:cur + l].mean(axis=0))
        cur += l
    means = np.stack(means).astype(np.float32)
    N = len(s_len_non_zero)
    s_embed = np.zeros((N, seq_len, h_dim), np.float32)
    gi = 0
    for i, l in enumerate(s_len_non_zero):
        s_embed[i, :l, :] = means[gi:gi + l]
        gi += l
    time_mat = np.full((N, seq_len), 1.0e6, np.float32)
    for i, ts in enumerate(s_time_sorted):
        time_mat[i, :len(ts)] = np.asarray(ts, np.float32)
    t_long = time_mat.astype(np.int64).astype(np.float32)
    # same f32 affine argument as the kernel path, then the true cos of that f32 value
    arg = (t_long[..., None] * np.asarray(t_w, np.float32).reshape(1, 1, t_dim)
           + np.asarray(t_b, np.float32).reshape(1, 1, t_dim)).astype(np.float32)
    te = np.cos(arg.astype(np.float64)).astype(np.float32)
    return np.concatenate([s_embed, te], axis=-1)


if __name__ == "__main__":
    # Small deterministic problem consistent with the module's forward.
    h_dim, t_dim, seq_len = 32, 16, 8
    num_ents = 20
    s_len_non_zero = [3, 2]                 # N = 2 examples, 5 graph snapshots total
    len_s = [2, 3, 1, 4, 2]                 # neighbors per snapshot, total = 12
    total = sum(len_s)

    key = jax.random.PRNGKey(0)
    k1, k2, k3, k4 = jax.random.split(key, 4)
    ent_embeds = jax.random.normal(k1, (num_ents, h_dim), jnp.float32)
    t_w = jax.random.normal(k2, (t_dim,), jnp.float32) * 0.1
    t_b = jax.random.normal(k3, (t_dim,), jnp.float32)
    flat_s = np.asarray(jax.random.randint(k4, (total,), 0, num_ents))
    s_time_sorted = [[0.0, 3.0, 7.0], [1.0, 5.0]]   # per-example sorted time intervals

    out = mean_aggregator_forward(ent_embeds, flat_s, len_s, s_len_non_zero,
                                  s_time_sorted, t_w, t_b, seq_len, h_dim, t_dim)
    out = jax.block_until_ready(out)

    ref = reference_forward(ent_embeds, flat_s, len_s, s_len_non_zero,
                            s_time_sorted, t_w, t_b, seq_len, h_dim, t_dim)

    assert out.shape == (len(s_len_non_zero), seq_len, h_dim + t_dim), out.shape
    np.testing.assert_allclose(np.asarray(out), ref, rtol=1e-4, atol=1e-4)
    print("KERNEL_OK")
</pallas_src>

<mosaic_0001>
module attributes {stable_mosaic.version = 11 : i64} {
  func.func @_seg_mean_kernel(%arg0: i32, %arg1: i32, %arg2: memref<8x128xf32, #tpu.memory_space<vmem>>, %arg3: memref<128x128xf32, #tpu.memory_space<vmem>>, %arg4: memref<8x128xf32, #tpu.memory_space<vmem>>) attributes {dimension_semantics = [#tpu.dimension_semantics<parallel>, #tpu.dimension_semantics<arbitrary>], iteration_bounds = array<i64: 1, 1>, scalar_prefetch = 0 : i64, scratch_operands = 0 : i64, tpu.core_type = #tpu.core_type<tc>, window_params = [{transform_indices = @transform_0, window_bounds = array<i64: 8, 128>}, {transform_indices = @transform_1, window_bounds = array<i64: 128, 128>}, {transform_indices = @transform_2, window_bounds = array<i64: 8, 128>}]} {
    %c0_i32 = arith.constant 0 : i32
    %0 = arith.cmpi eq, %arg1, %c0_i32 : i32
    %1 = arith.extui %0 : i1 to i32
    %c0_i32_0 = arith.constant 0 : i32
    %2 = arith.cmpi ne, %1, %c0_i32_0 : i32
    scf.if %2 {
      %cst_8 = arith.constant 0.000000e+00 : f32
      %9 = vector.broadcast %cst_8 : f32 to vector<8x128xf32>
      %c0_9 = arith.constant 0 : index
      %c0_10 = arith.constant 0 : index
      %10 = vector.load %arg4[%c0_9, %c0_10] : memref<8x128xf32, #tpu.memory_space<vmem>>, vector<8x128xf32>
      tpu.vector_store %arg4[%c0_9, %c0_10], %9 {strides = array<i32>} : memref<8x128xf32, #tpu.memory_space<vmem>>, vector<8x128xf32>,
    } else {
    }
    %c0 = arith.constant 0 : index
    %c0_1 = arith.constant 0 : index
    %3 = vector.load %arg4[%c0, %c0_1] : memref<8x128xf32, #tpu.memory_space<vmem>>, vector<8x128xf32>
    %c0_2 = arith.constant 0 : index
    %c0_3 = arith.constant 0 : index
    %4 = vector.load %arg2[%c0_2, %c0_3] : memref<8x128xf32, #tpu.memory_space<vmem>>, vector<8x128xf32>
    %c0_4 = arith.constant 0 : index
    %c0_5 = arith.constant 0 : index
    %5 = vector.load %arg3[%c0_4, %c0_5] : memref<128x128xf32, #tpu.memory_space<vmem>>, vector<128x128xf32>
    %cst = arith.constant dense<0.000000e+00> : vector<8x128xf32>
    %6 = tpu.matmul %4, %5, %cst {dimension_numbers = #tpu.dot_dimension_numbers<[1], [0], [0], [1], [0, 0, 1, 1], [], []>} : vector<8x128xf32>, vector<128x128xf32>, vector<8x128xf32> -> vector<8x128xf32>
    %7 = arith.addf %3, %6 : vector<8x128xf32>
    %c0_6 = arith.constant 0 : index
    %c0_7 = arith.constant 0 : index
    %8 = vector.load %arg4[%c0_6, %c0_7] : memref<8x128xf32, #tpu.memory_space<vmem>>, vector<8x128xf32>
    tpu.vector_store %arg4[%c0_6, %c0_7], %7 {strides = array<i32>} : memref<8x128xf32, #tpu.memory_space<vmem>>, vector<8x128xf32>,
    return
  }
  func.func @transform_0(%arg0: i32, %arg1: i32) -> (i32, i32) {
    %c0_i32 = arith.constant 0 : i32
    return %arg0, %arg1 : i32, i32
  }
  func.func @transform_1(%arg0: i32, %arg1: i32) -> (i32, i32) {
    %c0_i32 = arith.constant 0 : i32
    %c0_i32_0 = arith.constant 0 : i32
    return %arg1, %c0_i32 : i32, i32
  }
  func.func @transform_2(%arg0: i32, %arg1: i32) -> (i32, i32) {
    %c0_i32 = arith.constant 0 : i32
    %c0_i32_0 = arith.constant 0 : i32
    return %arg0, %c0_i32 : i32, i32
  }
}

</mosaic_0001>

<llo_original>
// kernel: tpu_custom_call.1
$region0: #{tpu_custom_call.1}
  #allocation0 [shape = 'u32[]', space=smem, size = 0x4, offset = 0x4, fixed_abs, tag = 'smem constant byte address 0x4 - core index']
  #allocation1 [shape = 'u32[72,128]{1,0:T(1,128)}', space=vmem, size = 0x9000, scoped, tag = 'internal scratch']
  %s0 = inlined_call_operand.hbm [shape: f32[8,128], index: 0, kind: input, shape index: {}]
  %s1 = inlined_call_operand.hbm [shape: f32[128,128], index: 1, kind: input, shape index: {}]
  %s2 = inlined_call_operand.hbm [shape: f32[8,128], index: 2, kind: output, shape index: {}]
  %s3 = sld [smem:[#allocation0]]
  $region30: #{tpu_custom_call.1} parent=0
    _
  %s5 = ssub.s32 1, %s3
  %s6 = scalar_select 0, %s5, %s3
  $region1: #{tpu_custom_call.1} parent=0
    #allocation2 [shape = 'u8[4096]{0}', space=vmem, size = 0x1000, scoped, tag = 'input window, operand 0, single buffered']
    #allocation3 [shape = 's32[1]{0}', space=sflag, size = 0x4, scoped, tag = 'scoped memory for tpu_custom_call.1']
    #allocation4 [shape = 's32[1]{0}', space=sflag, size = 0x4, scoped, tag = 'scoped memory for tpu_custom_call.1']
    #allocation5 [shape = 'u8[65536]{0}', space=vmem, size = 0x10000, scoped, tag = 'input window, operand 1, single buffered']
    #allocation6 [shape = 's32[1]{0}', space=sflag, size = 0x4, scoped, tag = 'scoped memory for tpu_custom_call.1']
    #allocation7 [shape = 'u8[4096]{0}', space=vmem, size = 0x1000, scoped, tag = 'output window, operand 0, single buffered']
    %7 = vsyncpa [#allocation3], 0
    %8 = vsyncpa [#allocation6], 0
    %9 = vsyncpa [#allocation4], 0
    // Predicated region
    $region2: #{tpu_custom_call.1} parent=1 // pred_check
      _
    $region3: #{tpu_custom_call.1} parent=1 // pred_check_branch
      %11 = sbr.rel (0) target = $region5
    $region4: #{tpu_custom_call.1} parent=1 // pred_region
      %13 = vsyncadd [#allocation3], 0
      %s15 = sshll.u32 %s0, 4
      %s16 = int_to_ptr.hbm [resolvable:$true] %s15
      %s17 = sshll.u32 [#allocation2], 4
      %s18 = int_to_ptr.vmem [resolvable:$true] %s17
      %20 = dma.hbm_to_vmem [thread:$0]  %s16, 128, %s18, [#allocation3]
    $region5: #{tpu_custom_call.1} parent=1 // pred_fallthru
      _
    // Predicated region
    $region6: #{tpu_custom_call.1} parent=1 // pred_check
      _
    $region7: #{tpu_custom_call.1} parent=1 // pred_check_branch
      %22 = sbr.rel (0) target = $region9
    $region8: #{tpu_custom_call.1} parent=1 // pred_region
      %24 = vsyncadd [#allocation6], 0
      %s25 = sshll.u32 %s1, 4
      %s26 = int_to_ptr.hbm [resolvable:$true] %s25
      %s27 = sshll.u32 [#allocation5], 4
      %s28 = int_to_ptr.vmem [resolvable:$true] %s27
      %33 = dma.hbm_to_vmem [thread:$0]  %s26, 2048, %s28, [#allocation6], 128, 128, 8
    $region9: #{tpu_custom_call.1} parent=1 // pred_fallthru
      _
    // Predicated region
    $region10: #{tpu_custom_call.1} parent=1 // pred_check
      _
    $region11: #{tpu_custom_call.1} parent=1 // pred_check_branch
      %35 = sbr.rel (0) target = $region13
    $region12: #{tpu_custom_call.1} parent=1 // pred_region
      %37 = dma.done [#allocation3], 128
    $region13: #{tpu_custom_call.1} parent=1 // pred_fallthru
      _
    // Predicated region
    $region14: #{tpu_custom_call.1} parent=1 // pred_check
      _
    $region15: #{tpu_custom_call.1} parent=1 // pred_check_branch
      %39 = sbr.rel (0) target = $region17
    $region16: #{tpu_custom_call.1} parent=1 // pred_region
      %41 = dma.done [#allocation6], 2048
    $region17: #{tpu_custom_call.1} parent=1 // pred_fallthru
      _
    %p42 = scmp.eq.s32.totalorder 0, 0
    // Predicated region
    $region18: #{tpu_custom_call.1} parent=1 // pred_check
      %p43 = pneg %p42
    $region19: #{tpu_custom_call.1} parent=1 // pred_check_branch
      %45 = sbr.rel (%p43) target = $region21
    $region20: #{tpu_custom_call.1} parent=1 // pred_region
      %46 = vst [vmem:[#allocation7] sm:$0xff] 0.0
    $region21: #{tpu_custom_call.1} parent=1 // pred_fallthru
      _
    %v47 = vld [vmem:[#allocation7] sm:$0xff]
    %v48 = vld [vmem:[#allocation2] sm:$0xff]
    %v49 = vld [vmem:[#allocation5] sm:$0xff]
    %v50 = vld [vmem:[#allocation5 + $0x8] sm:$0xff]
    %v51 = vld [vmem:[#allocation5 + $0x10] sm:$0xff]
    %v52 = vld [vmem:[#allocation5 + $0x18] sm:$0xff]
    %v53 = vld [vmem:[#allocation5 + $0x20] sm:$0xff]
    %v54 = vld [vmem:[#allocation5 + $0x28] sm:$0xff]
    %v55 = vld [vmem:[#allocation5 + $0x30] sm:$0xff]
    %v56 = vld [vmem:[#allocation5 + $0x38] sm:$0xff]
    %v57 = vld [vmem:[#allocation5 + $0x40] sm:$0xff]
    %v58 = vld [vmem:[#allocation5 + $0x48] sm:$0xff]
    %v59 = vld [vmem:[#allocation5 + $0x50] sm:$0xff]
    %v60 = vld [vmem:[#allocation5 + $0x58] sm:$0xff]
    %v61 = vld [vmem:[#allocation5 + $0x60] sm:$0xff]
    %v62 = vld [vmem:[#allocation5 + $0x68] sm:$0xff]
    %v63 = vld [vmem:[#allocation5 + $0x70] sm:$0xff]
    %v64 = vld [vmem:[#allocation5 + $0x78] sm:$0xff]
    %65 = vmatpush.msra.mxu0 %v64
    %66 = vmatpush.msra.mxu0 %v63
    %67 = vmatpush.msra.mxu0 %v62
    %68 = vmatpush.msra.mxu0 %v61
    %69 = vmatpush.msra.mxu0 %v60
    %70 = vmatpush.msra.mxu0 %v59
    %71 = vmatpush.msra.mxu0 %v58
    %72 = vmatpush.msra.mxu0 %v57
    %73 = vmatpush.msra.mxu0 %v56
    %74 = vmatpush.msra.mxu0 %v55
    %75 = vmatpush.msra.mxu0 %v54
    %76 = vmatpush.msra.mxu0 %v53
    %77 = vmatpush.msra.mxu0 %v52
    %78 = vmatpush.msra.mxu0 %v51
    %79 = vmatpush.msra.mxu0 %v50
    %80 = vmatpush.msra.mxu0 %v49
    %81 = vmatmul.f32.gmra.mxu0 %v48
    %v82 = vpop.f32.mrf.mxu0
    %v83 = vadd.f32 0.0, %v82
    %84 = vdwg.mxu0
    %v85 = vadd.f32 %v47, %v83
    %86 = vst [vmem:[#allocation7] sm:$0xff] %v85
    // Predicated region
    $region22: #{tpu_custom_call.1} parent=1 // pred_check
      _
    $region23: #{tpu_custom_call.1} parent=1 // pred_check_branch
      %88 = sbr.rel (0) target = $region25
    $region24: #{tpu_custom_call.1} parent=1 // pred_region
      %90 = vsyncadd [#allocation4], 0
      %s92 = sshll.u32 [#allocation7], 4
      %s93 = int_to_ptr.vmem [resolvable:$true] %s92
      %s94 = sshll.u32 %s2, 4
      %s95 = int_to_ptr.hbm [resolvable:$true] %s94
      %97 = dma.vmem_to_hbm [thread:$0]  %s93, 128, %s95, [#allocation4]
    $region25: #{tpu_custom_call.1} parent=1 // pred_fallthru
      _
    // Predicated region
    $region26: #{tpu_custom_call.1} parent=1 // pred_check
      _
    $region27: #{tpu_custom_call.1} parent=1 // pred_check_branch
      %99 = sbr.rel (0) target = $region29
    $region28: #{tpu_custom_call.1} parent=1 // pred_region
      %101 = dma.done [#allocation4], 128
    $region29: #{tpu_custom_call.1} parent=1 // pred_fallthru
      _
    %102 = vsyncpa [#allocation3], 1
    %103 = vsyncpa [#allocation6], 1
    %104 = vsyncpa [#allocation4], 1

</llo_original>
